<compile_context>
chip_gen: v7x
topology: tpu7x:2x2x1
jax: 0.10.0
libtpu: 0.0.40
codegen_flags: <defaults>
</compile_context>

<pallas_src>
import jax
import jax.numpy as jnp
from jax.experimental import pallas as pl
from jax.experimental.pallas import tpu as pltpu

# CartPole-like env dimensions: observation dim 4, 2 actions.
N_STATES = 4
N_ACTIONS = 2
HIDDEN = 50

# TPU-friendly padded dimensions.
N_STATES_P = 8     # 4  -> 8   (sublane-aligned feature dim, transposed path)
HIDDEN_P = 64      # 50 -> 64  (hidden dim)
N_ACTIONS_P = 8    # 2  -> 8   (sublane-aligned action dim, transposed path)

LANE = 128
SMALL_BATCH_MAX = 128   # <= this: single fused latency kernel (DQN act() path)
BLOCK_ROWS_CAP = 2048   # batch rows (lanes) per grid block; sweep 1024-4096


def _cdiv(a, b):
    return -(-a // b)


def _round_up(a, m):
    return _cdiv(a, m) * m


# ---------------------------------------------------------------------------
# Kernels
# ---------------------------------------------------------------------------
def mlp_small_kernel(x_ref, w1_ref, b1_ref, w2_ref, b2_ref, o_ref):
    """Latency path: whole problem in VMEM, unpadded input and output.

    x: (B, 4)  w1: (4, 64)  b1: (1, 64)  w2: (64, 8)  b2: (1, 8)  o: (B, 2)
    """
    x = x_ref[...]
    # fc1 as 4 VPU broadcast-FMAs: only 4 real features, so a K=4 MXU matmul
    # would be <6% utilized; this keeps the acting path off the MXU entirely
    # for fc1.
    h = x[:, 0:1] * w1_ref[0:1, :]
    for s in range(1, N_STATES):
        h = h + x[:, s:s + 1] * w1_ref[s:s + 1, :]
    h = jnp.maximum(h + b1_ref[...], 0.0)                        # (B, 64)
    y = jnp.dot(h, w2_ref[...],
                preferred_element_type=jnp.float32) + b2_ref[...]  # (B, 8)
    o_ref[...] = y[:, :N_ACTIONS]                                 # (B, 2)
    # TODO(synk): for the eps-greedy acting path, fuse argmax here and emit a
    # single int32 per row instead of the q-values.


def mlp_wide_kernel(xt_ref, w1_ref, b1_ref, w2_ref, b2_ref, ot_ref):
    """Throughput path: batch lives on the 128-lane axis.

    xt: (8, bm)  w1: (64, 8)  b1: (64, 1)  w2: (8, 64)  b2: (8, 1)
    ot: (8, bm)   (only rows [:2] carry real q-values)
    """
    h = jnp.dot(w1_ref[...], xt_ref[...], preferred_element_type=jnp.float32)
    h = jnp.maximum(h + b1_ref[...], 0.0)                         # (64, bm)
    ot_ref[...] = (jnp.dot(w2_ref[...], h,
                           preferred_element_type=jnp.float32) + b2_ref[...])


# ---------------------------------------------------------------------------
# Parameter preparation (one-time layout plumbing; zero padding is exact)
# ---------------------------------------------------------------------------
def _pad_to(a, shape):
    return jnp.pad(a, [(0, t - s) for s, t in zip(a.shape, shape)]
                   ).astype(jnp.float32)


def prepare_params(w1, b1, w2, b2):
    """w1: (50, 4) fc1.weight, b1: (1, 50), w2: (2, 50) out.weight, b2: (1, 2)."""
    return {
        # Row-major set for the small/latency kernel.
        "w1_rm": _pad_to(w1.T, (N_STATES, HIDDEN_P)),                  # (4, 64)
        "b1_rm": _pad_to(b1.reshape(1, HIDDEN), (1, HIDDEN_P)),        # (1, 64)
        "w2_rm": _pad_to(w2.T, (HIDDEN_P, N_ACTIONS_P)),               # (64, 8)
        "b2_rm": _pad_to(b2.reshape(1, N_ACTIONS), (1, N_ACTIONS_P)),  # (1, 8)
        # Transposed set for the large/throughput kernel.
        "w1_t": _pad_to(w1, (HIDDEN_P, N_STATES_P)),                   # (64, 8)
        "b1_t": _pad_to(b1.reshape(HIDDEN, 1), (HIDDEN_P, 1)),         # (64, 1)
        "w2_t": _pad_to(w2, (N_ACTIONS_P, HIDDEN_P)),                  # (8, 64)
        "b2_t": _pad_to(b2.reshape(N_ACTIONS, 1), (N_ACTIONS_P, 1)),   # (8, 1)
    }


# ---------------------------------------------------------------------------
# Forward pass
# ---------------------------------------------------------------------------
@jax.jit
def net_forward(x, params):
    """Forward of Net: returns (B, N_ACTIONS) f32 q-values."""
    x = x.astype(jnp.float32)
    B = x.shape[0]

    if B <= SMALL_BATCH_MAX:
        # Single fused op: raw (B, 4) in, (B, 2) q-values out.
        return pl.pallas_call(
            mlp_small_kernel,
            out_shape=jax.ShapeDtypeStruct((B, N_ACTIONS), jnp.float32),
            in_specs=[pl.BlockSpec(memory_space=pltpu.MemorySpace.VMEM)] * 5,
            out_specs=pl.BlockSpec(memory_space=pltpu.MemorySpace.VMEM),
        )(x, params["w1_rm"], params["b1_rm"], params["w2_rm"], params["b2_rm"])

    # Throughput path: >= 2 blocks so ("parallel",) shards across v7x's two
    # TensorCores; block rows rounded to 128 lanes (minimal padding) and
    # capped so pipelined VMEM stays well under every generation's limit
    # (block=2048 -> <1 MiB of buffers).
    nblocks = max(2, _cdiv(B, BLOCK_ROWS_CAP))
    block_b = _round_up(_cdiv(B, nblocks), LANE)
    Bp = nblocks * block_b

    # One small pad+transpose (16 B/row); everything downstream is lane-dense.
    xt = jnp.pad(x.T, ((0, N_STATES_P - N_STATES), (0, Bp - B)))

    out_t = pl.pallas_call(
        mlp_wide_kernel,
        out_shape=jax.ShapeDtypeStruct((N_ACTIONS_P, Bp), jnp.float32),
        grid_spec=pltpu.PrefetchScalarGridSpec(
            num_scalar_prefetch=0,
            grid=(nblocks,),
            in_specs=[
                pl.BlockSpec((N_STATES_P, block_b), lambda i: (0, i)),
                # Constant blocks: weights/biases stay resident in VMEM.
                pl.BlockSpec((HIDDEN_P, N_STATES_P), lambda i: (0, 0)),
                pl.BlockSpec((HIDDEN_P, 1), lambda i: (0, 0)),
                pl.BlockSpec((N_ACTIONS_P, HIDDEN_P), lambda i: (0, 0)),
                pl.BlockSpec((N_ACTIONS_P, 1), lambda i: (0, 0)),
            ],
            out_specs=pl.BlockSpec((N_ACTIONS_P, block_b), lambda i: (0, i)),
        ),
        compiler_params=pltpu.CompilerParams(
            dimension_semantics=("parallel",)),
    )(xt, params["w1_t"], params["b1_t"], params["w2_t"], params["b2_t"])

    # Cheap undo: 2 real action rows, B real batch columns.
    return out_t[:N_ACTIONS, :B].T


# ---------------------------------------------------------------------------
# Init / reference / demo
# ---------------------------------------------------------------------------
def init_params(key):
    k1, k2, k3, k4 = jax.random.split(key, 4)
    # weight.data.normal_(0, 0.1) as in the PyTorch module
    w1 = (0.1 * jax.random.normal(k1, (HIDDEN, N_STATES))).astype(jnp.float32)
    w2 = (0.1 * jax.random.normal(k2, (N_ACTIONS, HIDDEN))).astype(jnp.float32)
    # nn.Linear default bias init: U(-1/sqrt(fan_in), 1/sqrt(fan_in))
    b1 = jax.random.uniform(k3, (1, HIDDEN), jnp.float32,
                            minval=-1.0 / jnp.sqrt(N_STATES),
                            maxval=1.0 / jnp.sqrt(N_STATES))
    b2 = jax.random.uniform(k4, (1, N_ACTIONS), jnp.float32,
                            minval=-1.0 / jnp.sqrt(HIDDEN),
                            maxval=1.0 / jnp.sqrt(HIDDEN))
    return w1, b1, w2, b2


def _reference(x, w1, b1, w2, b2):
    return jnp.maximum(x @ w1.T + b1, 0.0) @ w2.T + b2


if __name__ == "__main__":
    key = jax.random.PRNGKey(0)
    pkey, xkey, xkey2 = jax.random.split(key, 3)
    w1, b1, w2, b2 = init_params(pkey)
    params = prepare_params(w1, b1, w2, b2)   # pre-transposed / padded, once

    # Small batch (single fused latency kernel), matching DQN act() usage.
    B = 2
    x = jax.random.normal(xkey, (B, N_STATES), jnp.float32)
    out = jax.block_until_ready(net_forward(x, params))
    ref = _reference(x, w1, b1, w2, b2)
    assert out.shape == (B, N_ACTIONS)
    assert jnp.allclose(out, ref, atol=1e-4, rtol=1e-4)

    # Larger batch exercises the transposed, batch-tiled "parallel" grid path.
    B2 = 1000
    x2 = jax.random.normal(xkey2, (B2, N_STATES), jnp.float32)
    out2 = jax.block_until_ready(net_forward(x2, params))
    ref2 = _reference(x2, w1, b1, w2, b2)
    assert out2.shape == (B2, N_ACTIONS)
    assert jnp.allclose(out2, ref2, atol=1e-4, rtol=1e-4)

    print("KERNEL_OK")
</pallas_src>

<mosaic_0001>
module attributes {stable_mosaic.version = 11 : i64} {
  func.func @mlp_small_kernel(%arg0: memref<2x4xf32, #tpu.memory_space<vmem>>, %arg1: memref<4x64xf32, #tpu.memory_space<vmem>>, %arg2: memref<1x64xf32, #tpu.memory_space<vmem>>, %arg3: memref<64x8xf32, #tpu.memory_space<vmem>>, %arg4: memref<1x8xf32, #tpu.memory_space<vmem>>, %arg5: memref<2x2xf32, #tpu.memory_space<vmem>>) attributes {dimension_semantics = [], scalar_prefetch = 0 : i64, scratch_operands = 0 : i64, tpu.core_type = #tpu.core_type<tc>} {
    %c0 = arith.constant 0 : index
    %c0_0 = arith.constant 0 : index
    %0 = vector.load %arg0[%c0, %c0_0] : memref<2x4xf32, #tpu.memory_space<vmem>>, vector<2x4xf32>
    %1 = vector.extract_strided_slice %0 {offsets = [0, 0], sizes = [2, 1], strides = [1, 1]} : vector<2x4xf32> to vector<2x1xf32>
    %c0_1 = arith.constant 0 : index
    %c0_2 = arith.constant 0 : index
    %2 = vector.load %arg1[%c0_1, %c0_2] : memref<4x64xf32, #tpu.memory_space<vmem>>, vector<1x64xf32>
    %3 = vector.broadcast %1 : vector<2x1xf32> to vector<2x64xf32>
    %4 = vector.broadcast %2 : vector<1x64xf32> to vector<2x64xf32>
    %5 = arith.mulf %3, %4 : vector<2x64xf32>
    %6 = vector.extract_strided_slice %0 {offsets = [0, 1], sizes = [2, 1], strides = [1, 1]} : vector<2x4xf32> to vector<2x1xf32>
    %c1 = arith.constant 1 : index
    %c0_3 = arith.constant 0 : index
    %7 = vector.load %arg1[%c1, %c0_3] : memref<4x64xf32, #tpu.memory_space<vmem>>, vector<1x64xf32>
    %8 = vector.broadcast %6 : vector<2x1xf32> to vector<2x64xf32>
    %9 = vector.broadcast %7 : vector<1x64xf32> to vector<2x64xf32>
    %10 = arith.mulf %8, %9 : vector<2x64xf32>
    %11 = arith.addf %5, %10 : vector<2x64xf32>
    %12 = vector.extract_strided_slice %0 {offsets = [0, 2], sizes = [2, 1], strides = [1, 1]} : vector<2x4xf32> to vector<2x1xf32>
    %c2 = arith.constant 2 : index
    %c0_4 = arith.constant 0 : index
    %13 = vector.load %arg1[%c2, %c0_4] : memref<4x64xf32, #tpu.memory_space<vmem>>, vector<1x64xf32>
    %14 = vector.broadcast %12 : vector<2x1xf32> to vector<2x64xf32>
    %15 = vector.broadcast %13 : vector<1x64xf32> to vector<2x64xf32>
    %16 = arith.mulf %14, %15 : vector<2x64xf32>
    %17 = arith.addf %11, %16 : vector<2x64xf32>
    %18 = vector.extract_strided_slice %0 {offsets = [0, 3], sizes = [2, 1], strides = [1, 1]} : vector<2x4xf32> to vector<2x1xf32>
    %c3 = arith.constant 3 : index
    %c0_5 = arith.constant 0 : index
    %19 = vector.load %arg1[%c3, %c0_5] : memref<4x64xf32, #tpu.memory_space<vmem>>, vector<1x64xf32>
    %20 = vector.broadcast %18 : vector<2x1xf32> to vector<2x64xf32>
    %21 = vector.broadcast %19 : vector<1x64xf32> to vector<2x64xf32>
    %22 = arith.mulf %20, %21 : vector<2x64xf32>
    %23 = arith.addf %17, %22 : vector<2x64xf32>
    %c0_6 = arith.constant 0 : index
    %c0_7 = arith.constant 0 : index
    %24 = vector.load %arg2[%c0_6, %c0_7] : memref<1x64xf32, #tpu.memory_space<vmem>>, vector<1x64xf32>
    %25 = vector.broadcast %24 : vector<1x64xf32> to vector<2x64xf32>
    %26 = arith.addf %23, %25 : vector<2x64xf32>
    %cst = arith.constant 0.000000e+00 : f32
    %27 = vector.broadcast %cst : f32 to vector<2x64xf32>
    %28 = arith.maximumf %26, %27 : vector<2x64xf32>
    %c0_8 = arith.constant 0 : index
    %c0_9 = arith.constant 0 : index
    %29 = vector.load %arg3[%c0_8, %c0_9] : memref<64x8xf32, #tpu.memory_space<vmem>>, vector<64x8xf32>
    %cst_10 = arith.constant dense<0.000000e+00> : vector<2x8xf32>
    %30 = tpu.matmul %28, %29, %cst_10 {dimension_numbers = #tpu.dot_dimension_numbers<[1], [0], [0], [1], [0, 0, 1, 1], [], []>} : vector<2x64xf32>, vector<64x8xf32>, vector<2x8xf32> -> vector<2x8xf32>
    %c0_11 = arith.constant 0 : index
    %c0_12 = arith.constant 0 : index
    %31 = vector.load %arg4[%c0_11, %c0_12] : memref<1x8xf32, #tpu.memory_space<vmem>>, vector<1x8xf32>
    %32 = vector.broadcast %31 : vector<1x8xf32> to vector<2x8xf32>
    %33 = arith.addf %30, %32 : vector<2x8xf32>
    %34 = vector.extract_strided_slice %33 {offsets = [0, 0], sizes = [2, 2], strides = [1, 1]} : vector<2x8xf32> to vector<2x2xf32>
    %c0_13 = arith.constant 0 : index
    %c0_14 = arith.constant 0 : index
    %35 = vector.load %arg5[%c0_13, %c0_14] : memref<2x2xf32, #tpu.memory_space<vmem>>, vector<2x2xf32>
    tpu.vector_store %arg5[%c0_13, %c0_14], %34 {strides = array<i32>} : memref<2x2xf32, #tpu.memory_space<vmem>>, vector<2x2xf32>,
    return
  }
}

</mosaic_0001>

<llo_original>
// kernel: net_forward.1
$region0: #{net_forward.1}
  #allocation0 [shape = 'u32[]', space=smem, size = 0x4, offset = 0x4, fixed_abs, tag = 'smem constant byte address 0x4 - core index']
  #allocation1 [shape = 'u32[144,128]{1,0:T(1,128)}', space=vmem, size = 0x12000, scoped, tag = 'internal scratch']
  %s0 = inlined_call_operand.vmem [shape: f32[2,4], index: 0, kind: input, shape index: {}]
  %s1 = inlined_call_operand.vmem [shape: f32[4,64], index: 1, kind: input, shape index: {}]
  %s2 = inlined_call_operand.vmem [shape: f32[1,64], index: 2, kind: input, shape index: {}]
  %s3 = inlined_call_operand.vmem [shape: f32[64,8], index: 3, kind: input, shape index: {}]
  %s4 = inlined_call_operand.vmem [shape: f32[1,8], index: 4, kind: input, shape index: {}]
  %s5 = inlined_call_operand.hbm [shape: f32[2,2], index: 5, kind: output, shape index: {}]
  %s6 = sld [smem:[#allocation0]]
  $region30: #{net_forward.1} parent=0
    _
  %s8 = ssub.s32 1, %s6
  %s9 = scalar_select 0, %s8, %s6
  $region1: #{net_forward.1} parent=0
    #allocation2 [shape = 'u8[1024]{0}', space=vmem, size = 0x400, scoped, tag = 'output window, operand 0, single buffered']
    #allocation3 [shape = 's32[1]{0}', space=sflag, size = 0x4, scoped, tag = 'scoped memory for net_forward.1']
    %10 = vsyncpa [#allocation3], 0
    // Predicated region
    $region2: #{net_forward.1} parent=1 // pred_check
      _
    $region3: #{net_forward.1} parent=1 // pred_check_branch
      %12 = sbr.rel (0) target = $region5
    $region4: #{net_forward.1} parent=1 // pred_region
      _
    $region5: #{net_forward.1} parent=1 // pred_fallthru
      _
    // Predicated region
    $region6: #{net_forward.1} parent=1 // pred_check
      _
    $region7: #{net_forward.1} parent=1 // pred_check_branch
      %14 = sbr.rel (0) target = $region9
    $region8: #{net_forward.1} parent=1 // pred_region
      _
    $region9: #{net_forward.1} parent=1 // pred_fallthru
      _
    // Predicated region
    $region10: #{net_forward.1} parent=1 // pred_check
      _
    $region11: #{net_forward.1} parent=1 // pred_check_branch
      %16 = sbr.rel (0) target = $region13
    $region12: #{net_forward.1} parent=1 // pred_region
      _
    $region13: #{net_forward.1} parent=1 // pred_fallthru
      _
    // Predicated region
    $region14: #{net_forward.1} parent=1 // pred_check
      _
    $region15: #{net_forward.1} parent=1 // pred_check_branch
      %18 = sbr.rel (0) target = $region17
    $region16: #{net_forward.1} parent=1 // pred_region
      _
    $region17: #{net_forward.1} parent=1 // pred_fallthru
      _
    // Predicated region
    $region18: #{net_forward.1} parent=1 // pred_check
      _
    $region19: #{net_forward.1} parent=1 // pred_check_branch
      %20 = sbr.rel (0) target = $region21
    $region20: #{net_forward.1} parent=1 // pred_region
      _
    $region21: #{net_forward.1} parent=1 // pred_fallthru
      _
    %v21 = vld [vmem:[%s0] sm:$0x3]
    %v22 = vld [vmem:[%s1] sm:$0x1]
    %24 = vset.pattern.permute.xlu0 0
    %25 = vperm.xlu0 %24, %v21
    %v26 = vpop.permute.xlu0 %25
    %v28 = vlaneseq
    %v29 = vshrl.u32 %v28, 7
    %v30 = vsub.s32 0, %v29
    %v31 = vrot.slane %v22, %v30
    %v32 = vmul.f32 %v26, %v31
    %v33 = vld [vmem:[%s1 + $0x1] sm:$0x1]
    %34 = vset.pattern.permute.xlu0 1
    %35 = vperm.xlu0 %34, %v21
    %v36 = vpop.permute.xlu0 %35
    %v38 = vlaneseq
    %v39 = vshrl.u32 %v38, 7
    %v40 = vsub.s32 0, %v39
    %v41 = vrot.slane %v33, %v40
    %v42 = vmul.f32 %v36, %v41
    %v43 = vadd.f32 %v32, %v42
    %v44 = vld [vmem:[%s1 + $0x2] sm:$0x1]
    %45 = vset.pattern.permute.xlu0 2
    %46 = vperm.xlu0 %45, %v21
    %v47 = vpop.permute.xlu0 %46
    %v49 = vlaneseq
    %v50 = vshrl.u32 %v49, 7
    %v51 = vsub.s32 0, %v50
    %v52 = vrot.slane %v44, %v51
    %v53 = vmul.f32 %v47, %v52
    %v54 = vadd.f32 %v43, %v53
    %v55 = vld [vmem:[%s1 + $0x3] sm:$0x1]
    %56 = vset.pattern.permute.xlu0 3
    %57 = vperm.xlu0 %56, %v21
    %v58 = vpop.permute.xlu0 %57
    %v60 = vlaneseq
    %v61 = vshrl.u32 %v60, 7
    %v62 = vsub.s32 0, %v61
    %v63 = vrot.slane %v55, %v62
    %v64 = vmul.f32 %v58, %v63
    %v65 = vadd.f32 %v54, %v64
    %v66 = vld [vmem:[%s2] sm:$0x1]
    %v68 = vlaneseq
    %v69 = vshrl.u32 %v68, 7
    %v70 = vsub.s32 0, %v69
    %v71 = vrot.slane %v66, %v70
    %v73 = vadd.f32 %v65, %v71
    %v74 = vmax.f32 %v73, 0.0
    %v75 = vld [vmem:[%s3] sm:$0xff]
    %v76 = vld [vmem:[%s3 + $0x8] sm:$0xff]
    %v77 = vld [vmem:[%s3 + $0x10] sm:$0xff]
    %v78 = vld [vmem:[%s3 + $0x18] sm:$0xff]
    %v79 = vld [vmem:[%s3 + $0x20] sm:$0xff]
    %v80 = vld [vmem:[%s3 + $0x28] sm:$0xff]
    %v81 = vld [vmem:[%s3 + $0x30] sm:$0xff]
    %v82 = vld [vmem:[%s3 + $0x38] sm:$0xff]
    %v83 = vld [vmem:[%s4] sm:$0x1]
    %v85 = vlaneseq
    %v86 = vshrl.u32 %v85, 7
    %v87 = vsub.s32 0, %v86
    %v88 = vrot.slane %v83, %v87
    %vm90 = vcmask 523264
    %v92 = vsel %vm90, %v74, 0
    %94 = vmatprep.subr.mxu0 0.0
    %95 = vmatpush1.msra.mxu0 %v75
    %96 = vmatprep.subr.mxu0 0.0
    %97 = vmatpush1.msra.mxu0 %v76
    %98 = vmatprep.subr.mxu0 0.0
    %99 = vmatpush1.msra.mxu0 %v77
    %100 = vmatprep.subr.mxu0 0.0
    %101 = vmatpush1.msra.mxu0 %v78
    %102 = vmatprep.subr.mxu0 0.0
    %103 = vmatpush1.msra.mxu0 %v79
    %104 = vmatprep.subr.mxu0 0.0
    %105 = vmatpush1.msra.mxu0 %v80
    %106 = vmatprep.subr.mxu0 0.0
    %107 = vmatpush1.msra.mxu0 %v81
    %108 = vmatprep.subr.mxu0 0.0
    %109 = vmatpush1.msra.mxu0 %v82
    %110 = vmatprep.subr.mxu0 0.0
    %111 = vmatpush1.msra.mxu0 0.0
    %112 = vmatprep.subr.mxu0 0.0
    %113 = vmatpush1.msra.mxu0 0.0
    %114 = vmatprep.subr.mxu0 0.0
    %115 = vmatpush1.msra.mxu0 0.0
    %116 = vmatprep.subr.mxu0 0.0
    %117 = vmatpush1.msra.mxu0 0.0
    %118 = vmatprep.subr.mxu0 0.0
    %119 = vmatpush1.msra.mxu0 0.0
    %120 = vmatprep.subr.mxu0 0.0
    %121 = vmatpush1.msra.mxu0 0.0
    %122 = vmatprep.subr.mxu0 0.0
    %123 = vmatpush1.msra.mxu0 0.0
    %124 = vmatprep.subr.mxu0 0.0
    %125 = vmatpush1.msra.mxu0 0.0
    %126 = vmatprep.subr.mxu0 0.0
    %127 = vmatpush1.msra.mxu0 0.0
    %128 = vmatprep.subr.mxu0 0.0
    %129 = vmatpush1.msra.mxu0 0.0
    %130 = vmatprep.subr.mxu0 0.0
    %131 = vmatpush1.msra.mxu0 0.0
    %132 = vmatprep.subr.mxu0 0.0
    %133 = vmatpush1.msra.mxu0 0.0
    %134 = vmatprep.subr.mxu0 0.0
    %135 = vmatpush1.msra.mxu0 0.0
    %136 = vmatprep.subr.mxu0 0.0
    %137 = vmatpush1.msra.mxu0 0.0
    %138 = vmatprep.subr.mxu0 0.0
    %139 = vmatpush1.msra.mxu0 0.0
    %140 = vmatprep.subr.mxu0 0.0
    %141 = vmatpush1.msra.mxu0 0.0
    %142 = vmatprep.subr.mxu0 0.0
    %143 = vmatpush1.msra.mxu0 0.0
    %144 = vmatprep.subr.mxu0 0.0
    %145 = vmatpush1.msra.mxu0 0.0
    %146 = vmatprep.subr.mxu0 0.0
    %147 = vmatpush1.msra.mxu0 0.0
    %148 = vmatprep.subr.mxu0 0.0
    %149 = vmatpush1.msra.mxu0 0.0
    %150 = vmatprep.subr.mxu0 0.0
    %151 = vmatpush1.msra.mxu0 0.0
    %152 = vmatprep.subr.mxu0 0.0
    %153 = vmatpush1.msra.mxu0 0.0
    %154 = vmatprep.subr.mxu0 0.0
    %155 = vmatpush1.msra.mxu0 0.0
    %156 = vmatprep.subr.mxu0 0.0
    %157 = vmatpush1.msra.mxu0 0.0
    %158 = vmatprep.mubr.f32.mxu0 0.0
    %159 = vmatmul.mubr.f32.gmra.mrb[0].mxu0 %v92
    %v160 = vpop.f32.mrb[0].mxu0
    %v161 = vadd.f32 %v88, %v160
    %v162 = vpop.f32.mrb[0].mxu0
    %163 = vdwg.mxu0
    %vm164 = vcmask 9216
    %165 = vst.msk [vmem:[#allocation2] sm:$0x3] %vm164, %v161
    // Predicated region
    $region22: #{net_forward.1} parent=1 // pred_check
      _
    $region23: #{net_forward.1} parent=1 // pred_check_branch
      %167 = sbr.rel (0) target = $region25
    $region24: #{net_forward.1} parent=1 // pred_region
      %s169 = ssub.s32 32, 32
      %170 = vsyncadd [#allocation3], %s169
      %s172 = sshll.u32 [#allocation2], 4
      %s173 = int_to_ptr.vmem [resolvable:$true] %s172
      %175 = dma.vmem_to_hbm [thread:$0]  %s173, 32, %s5, [#allocation3]
    $region25: #{net_forward.1} parent=1 // pred_fallthru
      _
    // Predicated region
    $region26: #{net_forward.1} parent=1 // pred_check
      _
    $region27: #{net_forward.1} parent=1 // pred_check_branch
      %177 = sbr.rel (0) target = $region29
    $region28: #{net_forward.1} parent=1 // pred_region
      %178 = dma.done [#allocation3], 32
    $region29: #{net_forward.1} parent=1 // pred_fallthru
      _
    %179 = vsyncpa [#allocation3], 1

</llo_original>
